<compile_context>
chip_gen: v6e
topology: v6e:2x2x1
jax: 0.10.0
libtpu: 0.0.40
codegen_flags: <defaults>
</compile_context>

<pallas_src>
import functools

import jax
import jax.numpy as jnp
from jax.experimental import pallas as pl
from jax.experimental.pallas import tpu as pltpu

VMEM = functools.partial(pl.BlockSpec, memory_space=pltpu.MemorySpace.VMEM)

IN_FEATS = 117
_LANE = 128
_SUBLANE = 8
_COMPUTE_DTYPE = jnp.bfloat16  # MXU-native operand dtype (f32 accumulation)


def _round_up(x, m):
    return (x + m - 1) // m * m


_ACTIVATIONS = {
    "relu": lambda x: jnp.maximum(x, 0.0),
    "tanh": jnp.tanh,
    "sigmoid": jax.nn.sigmoid,
    "elu": jax.nn.elu,
    "leaky_relu": jax.nn.leaky_relu,
}


# ---------------------------------------------------------------- kernel ----

def _make_fused_kernel(ops, n_sage):
    """Build the fused forward kernel.

    ops: static list of ("sage", layer_idx) | ("act", fn) | ("drop", None),
         unrolled at trace time inside the kernel body.
    Kernel refs: h0, adj, w_in, b_in, (wcat_i, b_i) * n_sage, out.
    """

    def kernel(*refs):
        h0_ref, adj_ref, w_in_ref, b_in_ref = refs[:4]
        layer_refs = refs[4:4 + 2 * n_sage]
        out_ref = refs[4 + 2 * n_sage]

        # Degree-normalized adjacency, computed once and reused by every layer.
        adj = adj_ref[...]
        deg = jnp.sum(adj, axis=1, keepdims=True)
        inv_deg = jnp.where(deg > 0.0, 1.0 / jnp.maximum(deg, 1.0), 0.0)
        adj_norm = (adj * inv_deg).astype(_COMPUTE_DTYPE)

        # f_in: tanh(h0 @ W_in + b_in)  (tanh on the EUP, f32)
        h = jnp.tanh(
            jnp.dot(h0_ref[...].astype(_COMPUTE_DTYPE), w_in_ref[...],
                    preferred_element_type=jnp.float32)
            + b_in_ref[...]
        )

        for kind, payload in ops:
            if kind == "sage":
                w_ref = layer_refs[2 * payload]
                b_ref = layer_refs[2 * payload + 1]
                h_c = h.astype(_COMPUTE_DTYPE)
                # mean aggregation over in-neighbors
                agg = jnp.dot(adj_norm, h_c, preferred_element_type=jnp.float32)
                # single K=2*F matmul against stacked [W_self; W_neigh]
                x = jnp.concatenate([h_c, agg.astype(_COMPUTE_DTYPE)], axis=1)
                h = jnp.dot(x, w_ref[...], preferred_element_type=jnp.float32) + b_ref[...]
            elif kind == "act":
                h = payload(h)
            # "drop": eval-mode dropout == identity

        out_ref[...] = h.astype(out_ref.dtype)

    return kernel


# ---------------------------------------------------------------- model -----

class NetPallas:
    """JAX/Pallas port of Net(config, input_units=...), fused into one kernel."""

    def __init__(self, config, key, input_units=128):
        self.ops = []              # static op sequence unrolled inside the kernel
        dims = [input_units]
        sage_dims = []

        for exe in config:
            try:
                exe = float(exe)
                if exe >= 1:
                    exe = int(exe)
            except (TypeError, ValueError):
                pass
            if isinstance(exe, int):
                sage_dims.append((dims[-1], exe))
                dims.append(exe)
                self.ops.append(("sage", len(sage_dims) - 1))
            elif isinstance(exe, str):
                self.ops.append(("act", _ACTIVATIONS[exe]))
            elif isinstance(exe, float):
                # TODO(synk): Dropout implemented as eval-mode identity (no RNG).
                self.ops.append(("drop", None))

        self.out_dim = dims[-1]
        self.feat_pad = _round_up(max(max(dims), _LANE), _LANE)   # lane-dense widths
        self.in_pad = _round_up(IN_FEATS, _LANE)                  # 117 -> 128 contraction
        fp = self.feat_pad

        # f_in: torch Linear(117, input_units). Stored transposed [in, out],
        # zero-padded to [128, feat_pad]; weights kept in bf16 (MXU operands).
        k_w, k_b, key = jax.random.split(key, 3)
        w_in = jax.random.normal(k_w, (IN_FEATS, input_units), jnp.float32) / jnp.sqrt(IN_FEATS)
        self.w_in = (jnp.zeros((self.in_pad, fp), jnp.float32)
                     .at[:IN_FEATS, :input_units].set(w_in)).astype(_COMPUTE_DTYPE)
        self.b_in = (jnp.zeros((1, fp), jnp.float32)
                     .at[0, :input_units].set(jax.random.normal(k_b, (input_units,)) * 0.01))

        # SAGE layers: stacked [W_self; W_neigh] -> [2*fp, fp], zero-padded.
        # (DGL mean-SAGEConv has a single bias added after the sum; same here.)
        self.sage_params = []
        for din, dout in sage_dims:
            k1, k2, k3, key = jax.random.split(key, 4)
            w_self = jax.random.normal(k1, (din, dout), jnp.float32) / jnp.sqrt(din)
            w_neigh = jax.random.normal(k2, (din, dout), jnp.float32) / jnp.sqrt(din)
            bias = jax.random.normal(k3, (dout,), jnp.float32) * 0.01
            wcat = (jnp.zeros((2 * fp, fp), jnp.float32)
                    .at[:din, :dout].set(w_self)
                    .at[fp:fp + din, :dout].set(w_neigh)).astype(_COMPUTE_DTYPE)
            b = jnp.zeros((1, fp), jnp.float32).at[0, :dout].set(bias)
            self.sage_params.append((wcat, b))

        self._kernel = _make_fused_kernel(self.ops, len(self.sage_params))

    def forward(self, h0, adj):
        # h0: [N, 117] atom node features; adj: [N, N] dense f32 adjacency (A[dst, src]).
        n = h0.shape[0]
        n_pad = _round_up(max(n, _SUBLANE), _SUBLANE)
        fp = self.feat_pad

        h0_pad = jnp.zeros((n_pad, self.in_pad), jnp.float32).at[:n, :IN_FEATS].set(h0)
        adj_pad = jnp.zeros((n_pad, n_pad), jnp.float32).at[:n, :n].set(adj)

        args = [h0_pad, adj_pad, self.w_in, self.b_in]
        for wcat, b in self.sage_params:
            args += [wcat, b]

        out = pl.pallas_call(
            self._kernel,
            out_shape=jax.ShapeDtypeStruct((n_pad, fp), jnp.float32),
            in_specs=[VMEM()] * len(args),
            out_specs=VMEM(),
        )(*args)

        # single slice back to the true node count / final layer width
        return out[:n, :self.out_dim]


# ---------------------------------------------------------------- main ------

if __name__ == "__main__":
    key = jax.random.PRNGKey(0)
    k_h, k_adj, k_params = jax.random.split(key, 3)

    N = 32  # number of atom nodes
    h0 = jax.random.normal(k_h, (N, IN_FEATS), jnp.float32)

    # random sparse atom_neighbors_atom graph (no self loops), dense f32 adjacency
    adj = (jax.random.uniform(k_adj, (N, N)) < 0.15).astype(jnp.float32)
    adj = adj * (1.0 - jnp.eye(N, dtype=jnp.float32))

    config = [64.0, "relu", 0.5, 32, "relu"]
    net = NetPallas(config, k_params, input_units=128)

    out = net.forward(h0, adj)
    jax.block_until_ready(out)
    assert out.shape == (N, 32)
    print("KERNEL_OK")
</pallas_src>

<mosaic_0001>
module attributes {stable_mosaic.version = 11 : i64} {
  func.func @kernel(%arg0: memref<32x128xf32, #tpu.memory_space<vmem>>, %arg1: memref<32x32xf32, #tpu.memory_space<vmem>>, %arg2: memref<128x128xbf16, #tpu.memory_space<vmem>>, %arg3: memref<1x128xf32, #tpu.memory_space<vmem>>, %arg4: memref<256x128xbf16, #tpu.memory_space<vmem>>, %arg5: memref<1x128xf32, #tpu.memory_space<vmem>>, %arg6: memref<256x128xbf16, #tpu.memory_space<vmem>>, %arg7: memref<1x128xf32, #tpu.memory_space<vmem>>, %arg8: memref<32x128xf32, #tpu.memory_space<vmem>>) attributes {dimension_semantics = [], scalar_prefetch = 0 : i64, scratch_operands = 0 : i64, tpu.core_type = #tpu.core_type<tc>} {
    %c0 = arith.constant 0 : index
    %c0_0 = arith.constant 0 : index
    %0 = vector.load %arg1[%c0, %c0_0] : memref<32x32xf32, #tpu.memory_space<vmem>>, vector<32x32xf32>
    %cst = arith.constant dense<0.000000e+00> : vector<32xf32>
    %1 = vector.multi_reduction <add>, %0, %cst [1] : vector<32x32xf32> to vector<32xf32>
    %2 = vector.shape_cast %1 : vector<32xf32> to vector<32x1xf32>
    %cst_1 = arith.constant 0.000000e+00 : f32
    %3 = vector.broadcast %cst_1 : f32 to vector<32x1xf32>
    %4 = arith.cmpf ogt, %2, %3 : vector<32x1xf32>
    %cst_2 = arith.constant 1.000000e+00 : f32
    %5 = vector.broadcast %cst_2 : f32 to vector<32x1xf32>
    %6 = arith.maximumf %2, %5 : vector<32x1xf32>
    %cst_3 = arith.constant 1.000000e+00 : f32
    %7 = vector.broadcast %cst_3 : f32 to vector<32x1xf32>
    %8 = arith.divf %7, %6 : vector<32x1xf32>
    %cst_4 = arith.constant 0.000000e+00 : f32
    %9 = vector.broadcast %cst_4 : f32 to vector<32x1xf32>
    %10 = arith.select %4, %8, %9 : vector<32x1xi1>, vector<32x1xf32>
    %11 = vector.broadcast %10 : vector<32x1xf32> to vector<32x32xf32>
    %12 = arith.mulf %0, %11 : vector<32x32xf32>
    %13 = arith.truncf %12 : vector<32x32xf32> to vector<32x32xbf16>
    %c0_5 = arith.constant 0 : index
    %c0_6 = arith.constant 0 : index
    %14 = vector.load %arg0[%c0_5, %c0_6] : memref<32x128xf32, #tpu.memory_space<vmem>>, vector<32x128xf32>
    %15 = arith.truncf %14 : vector<32x128xf32> to vector<32x128xbf16>
    %c0_7 = arith.constant 0 : index
    %c0_8 = arith.constant 0 : index
    %16 = vector.load %arg2[%c0_7, %c0_8] : memref<128x128xbf16, #tpu.memory_space<vmem>>, vector<128x128xbf16>
    %cst_9 = arith.constant dense<0.000000e+00> : vector<32x128xf32>
    %17 = tpu.matmul %15, %16, %cst_9 {dimension_numbers = #tpu.dot_dimension_numbers<[1], [0], [0], [1], [0, 0, 1, 1], [], []>} : vector<32x128xbf16>, vector<128x128xbf16>, vector<32x128xf32> -> vector<32x128xf32>
    %c0_10 = arith.constant 0 : index
    %c0_11 = arith.constant 0 : index
    %18 = vector.load %arg3[%c0_10, %c0_11] : memref<1x128xf32, #tpu.memory_space<vmem>>, vector<1x128xf32>
    %19 = vector.broadcast %18 : vector<1x128xf32> to vector<32x128xf32>
    %20 = arith.addf %17, %19 : vector<32x128xf32>
    %21 = math.tanh %20 : vector<32x128xf32>
    %22 = arith.truncf %21 : vector<32x128xf32> to vector<32x128xbf16>
    %cst_12 = arith.constant dense<0.000000e+00> : vector<32x128xf32>
    %23 = tpu.matmul %13, %22, %cst_12 {dimension_numbers = #tpu.dot_dimension_numbers<[1], [0], [0], [1], [0, 0, 1, 1], [], []>} : vector<32x32xbf16>, vector<32x128xbf16>, vector<32x128xf32> -> vector<32x128xf32>
    %24 = arith.truncf %23 : vector<32x128xf32> to vector<32x128xbf16>
    %25 = tpu.concatenate %22, %24 in 1 : vector<32x128xbf16>, vector<32x128xbf16> -> vector<32x256xbf16>
    %c0_13 = arith.constant 0 : index
    %c0_14 = arith.constant 0 : index
    %26 = vector.load %arg4[%c0_13, %c0_14] : memref<256x128xbf16, #tpu.memory_space<vmem>>, vector<256x128xbf16>
    %cst_15 = arith.constant dense<0.000000e+00> : vector<32x128xf32>
    %27 = tpu.matmul %25, %26, %cst_15 {dimension_numbers = #tpu.dot_dimension_numbers<[1], [0], [0], [1], [0, 0, 1, 1], [], []>} : vector<32x256xbf16>, vector<256x128xbf16>, vector<32x128xf32> -> vector<32x128xf32>
    %c0_16 = arith.constant 0 : index
    %c0_17 = arith.constant 0 : index
    %28 = vector.load %arg5[%c0_16, %c0_17] : memref<1x128xf32, #tpu.memory_space<vmem>>, vector<1x128xf32>
    %29 = vector.broadcast %28 : vector<1x128xf32> to vector<32x128xf32>
    %30 = arith.addf %27, %29 : vector<32x128xf32>
    %cst_18 = arith.constant 0.000000e+00 : f32
    %31 = vector.broadcast %cst_18 : f32 to vector<32x128xf32>
    %32 = arith.maximumf %30, %31 : vector<32x128xf32>
    %33 = arith.truncf %32 : vector<32x128xf32> to vector<32x128xbf16>
    %cst_19 = arith.constant dense<0.000000e+00> : vector<32x128xf32>
    %34 = tpu.matmul %13, %33, %cst_19 {dimension_numbers = #tpu.dot_dimension_numbers<[1], [0], [0], [1], [0, 0, 1, 1], [], []>} : vector<32x32xbf16>, vector<32x128xbf16>, vector<32x128xf32> -> vector<32x128xf32>
    %35 = arith.truncf %34 : vector<32x128xf32> to vector<32x128xbf16>
    %36 = tpu.concatenate %33, %35 in 1 : vector<32x128xbf16>, vector<32x128xbf16> -> vector<32x256xbf16>
    %c0_20 = arith.constant 0 : index
    %c0_21 = arith.constant 0 : index
    %37 = vector.load %arg6[%c0_20, %c0_21] : memref<256x128xbf16, #tpu.memory_space<vmem>>, vector<256x128xbf16>
    %cst_22 = arith.constant dense<0.000000e+00> : vector<32x128xf32>
    %38 = tpu.matmul %36, %37, %cst_22 {dimension_numbers = #tpu.dot_dimension_numbers<[1], [0], [0], [1], [0, 0, 1, 1], [], []>} : vector<32x256xbf16>, vector<256x128xbf16>, vector<32x128xf32> -> vector<32x128xf32>
    %c0_23 = arith.constant 0 : index
    %c0_24 = arith.constant 0 : index
    %39 = vector.load %arg7[%c0_23, %c0_24] : memref<1x128xf32, #tpu.memory_space<vmem>>, vector<1x128xf32>
    %40 = vector.broadcast %39 : vector<1x128xf32> to vector<32x128xf32>
    %41 = arith.addf %38, %40 : vector<32x128xf32>
    %cst_25 = arith.constant 0.000000e+00 : f32
    %42 = vector.broadcast %cst_25 : f32 to vector<32x128xf32>
    %43 = arith.maximumf %41, %42 : vector<32x128xf32>
    %c0_26 = arith.constant 0 : index
    %c0_27 = arith.constant 0 : index
    %44 = vector.load %arg8[%c0_26, %c0_27] : memref<32x128xf32, #tpu.memory_space<vmem>>, vector<32x128xf32>
    tpu.vector_store %arg8[%c0_26, %c0_27], %43 {strides = array<i32>} : memref<32x128xf32, #tpu.memory_space<vmem>>, vector<32x128xf32>,
    return
  }
}

</mosaic_0001>

<llo_original>
// kernel: tpu_custom_call.1
$region0: #{tpu_custom_call.1}
  #allocation0 [shape = 'u32[]', space=smem, size = 0x4, offset = 0x4, fixed_abs, tag = 'smem constant byte address 0x4 - core index']
  #allocation1 [shape = 'u32[144,128]{1,0:T(1,128)}', space=vmem, size = 0x12000, scoped, tag = 'internal scratch']
  %s0 = inlined_call_operand.hbm [shape: f32[32,128], index: 0, kind: input, shape index: {}]
  %s1 = inlined_call_operand.hbm [shape: f32[32,32], index: 1, kind: input, shape index: {}]
  %s2 = inlined_call_operand.hbm [shape: bf16[128,128], index: 2, kind: input, shape index: {}]
  %s3 = inlined_call_operand.vmem [shape: f32[1,128], index: 3, kind: input, shape index: {}]
  %s4 = inlined_call_operand.hbm [shape: bf16[256,128], index: 4, kind: input, shape index: {}]
  %s5 = inlined_call_operand.vmem [shape: f32[1,128], index: 5, kind: input, shape index: {}]
  %s6 = inlined_call_operand.hbm [shape: bf16[256,128], index: 6, kind: input, shape index: {}]
  %s7 = inlined_call_operand.vmem [shape: f32[1,128], index: 7, kind: input, shape index: {}]
  %s8 = inlined_call_operand.hbm [shape: f32[32,128], index: 8, kind: output, shape index: {}]
  %s9 = sld [smem:[#allocation0]]
  $region62: #{tpu_custom_call.1} parent=0
    _
  %s11 = ssub.s32 1, %s9
  %s12 = scalar_select 0, %s11, %s9
  $region1: #{tpu_custom_call.1} parent=0
    #allocation2 [shape = 'u8[16384]{0}', space=vmem, size = 0x4000, scoped, tag = 'input window, operand 0, single buffered']
    #allocation3 [shape = 's32[1]{0}', space=sflag, size = 0x4, scoped, tag = 'scoped memory for tpu_custom_call.1']
    #allocation4 [shape = 's32[1]{0}', space=sflag, size = 0x4, scoped, tag = 'scoped memory for tpu_custom_call.1']
    #allocation5 [shape = 'u8[16384]{0}', space=vmem, size = 0x4000, scoped, tag = 'input window, operand 1, single buffered']
    #allocation6 [shape = 's32[1]{0}', space=sflag, size = 0x4, scoped, tag = 'scoped memory for tpu_custom_call.1']
    #allocation7 [shape = 'u8[32768]{0}', space=vmem, size = 0x8000, scoped, tag = 'input window, operand 2, single buffered']
    #allocation8 [shape = 'u8[65536]{0}', space=vmem, size = 0x10000, scoped, tag = 'input window, operand 4, single buffered']
    #allocation9 [shape = 's32[1]{0}', space=sflag, size = 0x4, scoped, tag = 'scoped memory for tpu_custom_call.1']
    #allocation10 [shape = 'u8[65536]{0}', space=vmem, size = 0x10000, scoped, tag = 'input window, operand 6, single buffered']
    #allocation11 [shape = 'u8[16384]{0}', space=vmem, size = 0x4000, scoped, tag = 'output window, operand 0, single buffered']
    %13 = vsyncpa [#allocation3], 0
    %14 = vsyncpa [#allocation6], 0
    %15 = vsyncpa [#allocation9], 0
    %16 = vsyncpa [#allocation4], 0
    // Predicated region
    $region2: #{tpu_custom_call.1} parent=1 // pred_check
      _
    $region3: #{tpu_custom_call.1} parent=1 // pred_check_branch
      %18 = sbr.rel (0) target = $region5
    $region4: #{tpu_custom_call.1} parent=1 // pred_region
      %s20 = ssub.s32 512, 512
      %21 = vsyncadd [#allocation3], %s20
      %s22 = sshll.u32 [#allocation2], 4
      %s23 = int_to_ptr.vmem [resolvable:$true] %s22
      %28 = dma.hbm_to_vmem [thread:$0]  %s0, 512, %s23, [#allocation3], 128, 128, 8
    $region5: #{tpu_custom_call.1} parent=1 // pred_fallthru
      _
    // Predicated region
    $region6: #{tpu_custom_call.1} parent=1 // pred_check
      _
    $region7: #{tpu_custom_call.1} parent=1 // pred_check_branch
      %30 = sbr.rel (0) target = $region9
    $region8: #{tpu_custom_call.1} parent=1 // pred_region
      %s32 = ssub.s32 512, 512
      %33 = vsyncadd [#allocation6], %s32
      %s34 = sshll.u32 [#allocation5], 4
      %s35 = int_to_ptr.vmem [resolvable:$true] %s34
      %40 = dma.hbm_to_vmem [thread:$0]  %s1, 512, %s35, [#allocation6], 128, 128, 8
    $region9: #{tpu_custom_call.1} parent=1 // pred_fallthru
      _
    // Predicated region
    $region10: #{tpu_custom_call.1} parent=1 // pred_check
      _
    $region11: #{tpu_custom_call.1} parent=1 // pred_check_branch
      %42 = sbr.rel (0) target = $region13
    $region12: #{tpu_custom_call.1} parent=1 // pred_region
      %s44 = ssub.s32 1024, 1024
      %45 = vsyncadd [#allocation6], %s44
      %s46 = sshll.u32 [#allocation7], 4
      %s47 = int_to_ptr.vmem [resolvable:$true] %s46
      %52 = dma.hbm_to_vmem [thread:$0]  %s2, 1024, %s47, [#allocation6], 64, 64, 4
    $region13: #{tpu_custom_call.1} parent=1 // pred_fallthru
      _
    // Predicated region
    $region14: #{tpu_custom_call.1} parent=1 // pred_check
      _
    $region15: #{tpu_custom_call.1} parent=1 // pred_check_branch
      %54 = sbr.rel (0) target = $region17
    $region16: #{tpu_custom_call.1} parent=1 // pred_region
      _
    $region17: #{tpu_custom_call.1} parent=1 // pred_fallthru
      _
    // Predicated region
    $region18: #{tpu_custom_call.1} parent=1 // pred_check
      _
    $region19: #{tpu_custom_call.1} parent=1 // pred_check_branch
      %56 = sbr.rel (0) target = $region21
    $region20: #{tpu_custom_call.1} parent=1 // pred_region
      %s58 = ssub.s32 2048, 2048
      %59 = vsyncadd [#allocation9], %s58
      %s60 = sshll.u32 [#allocation8], 4
      %s61 = int_to_ptr.vmem [resolvable:$true] %s60
      %66 = dma.hbm_to_vmem [thread:$0]  %s4, 2048, %s61, [#allocation9], 64, 64, 4
    $region21: #{tpu_custom_call.1} parent=1 // pred_fallthru
      _
    // Predicated region
    $region22: #{tpu_custom_call.1} parent=1 // pred_check
      _
    $region23: #{tpu_custom_call.1} parent=1 // pred_check_branch
      %68 = sbr.rel (0) target = $region25
    $region24: #{tpu_custom_call.1} parent=1 // pred_region
      _
    $region25: #{tpu_custom_call.1} parent=1 // pred_fallthru
      _
    // Predicated region
    $region26: #{tpu_custom_call.1} parent=1 // pred_check
      _
    $region27: #{tpu_custom_call.1} parent=1 // pred_check_branch
      %70 = sbr.rel (0) target = $region29
    $region28: #{tpu_custom_call.1} parent=1 // pred_region
      %s72 = ssub.s32 2048, 2048
      %73 = vsyncadd [#allocation9], %s72
      %s74 = sshll.u32 [#allocation10], 4
      %s75 = int_to_ptr.vmem [resolvable:$true] %s74
      %80 = dma.hbm_to_vmem [thread:$0]  %s6, 2048, %s75, [#allocation9], 64, 64, 4
    $region29: #{tpu_custom_call.1} parent=1 // pred_fallthru
      _
    // Predicated region
    $region30: #{tpu_custom_call.1} parent=1 // pred_check
      _
    $region31: #{tpu_custom_call.1} parent=1 // pred_check_branch
      %82 = sbr.rel (0) target = $region33
    $region32: #{tpu_custom_call.1} parent=1 // pred_region
      _
    $region33: #{tpu_custom_call.1} parent=1 // pred_fallthru
      _
    // Predicated region
    $region34: #{tpu_custom_call.1} parent=1 // pred_check
      _
    $region35: #{tpu_custom_call.1} parent=1 // pred_check_branch
      %84 = sbr.rel (0) target = $region37
    $region36: #{tpu_custom_call.1} parent=1 // pred_region
      %85 = dma.done [#allocation3], 512
    $region37: #{tpu_custom_call.1} parent=1 // pred_fallthru
      _
    // Predicated region
    $region38: #{tpu_custom_call.1} parent=1 // pred_check
      _
    $region39: #{tpu_custom_call.1} parent=1 // pred_check_branch
      %87 = sbr.rel (0) target = $region41
    $region40: #{tpu_custom_call.1} parent=1 // pred_region
      %88 = dma.done [#allocation6], 512
    $region41: #{tpu_custom_call.1} parent=1 // pred_fallthru
      _
    // Predicated region
    $region42: #{tpu_custom_call.1} parent=1 // pred_check
      _
    $region43: #{tpu_custom_call.1} parent=1 // pred_check_branch
      %90 = sbr.rel (0) target = $region45
    $region44: #{tpu_custom_call.1} parent=1 // pred_region
      %91 = dma.done [#allocation6], 1024
    $region45: #{tpu_custom_call.1} parent=1 // pred_fallthru
      _
    // Predicated region
    $region46: #{tpu_custom_call.1} parent=1 // pred_check
      _
    $region47: #{tpu_custom_call.1} parent=1 // pred_check_branch
      %93 = sbr.rel (0) target = $region49
    $region48: #{tpu_custom_call.1} parent=1 // pred_region
      %94 = dma.done [#allocation9], 2048
    $region49: #{tpu_custom_call.1} parent=1 // pred_fallthru
      _
    // Predicated region
    $region50: #{tpu_custom_call.1} parent=1 // pred_check
      _
    $region51: #{tpu_custom_call.1} parent=1 // pred_check_branch
      %96 = sbr.rel (0) target = $region53
    $region52: #{tpu_custom_call.1} parent=1 // pred_region
      %97 = dma.done [#allocation9], 2048
    $region53: #{tpu_custom_call.1} parent=1 // pred_fallthru
      _
    %v99 = vld [vmem:[#allocation5] sm:$0xff]
    %v100 = vld [vmem:[#allocation5 + $0x8] sm:$0xff]
    %v101 = vld [vmem:[#allocation5 + $0x10] sm:$0xff]
    %v102 = vld [vmem:[#allocation5 + $0x18] sm:$0xff]
    %vm103 = vcmask 261120
    %v104 = vsel %vm103, %v99, 0.0
    %105 = vadd.xlane.f32.xlu0 %v104
    %v106 = vpop.xlane.xlu0 %105
    %v107 = vsel %vm103, %v100, 0.0
    %108 = vadd.xlane.f32.xlu0 %v107
    %v109 = vpop.xlane.xlu0 %108
    %v110 = vsel %vm103, %v101, 0.0
    %111 = vadd.xlane.f32.xlu0 %v110
    %v112 = vpop.xlane.xlu0 %111
    %v113 = vsel %vm103, %v102, 0.0
    %114 = vadd.xlane.f32.xlu0 %v113
    %v115 = vpop.xlane.xlu0 %114
    %vm116 = vcmp.gt.f32.partialorder %v106, 0.0
    %vm117 = vcmp.gt.f32.partialorder %v109, 0.0
    %vm118 = vcmp.gt.f32.partialorder %v112, 0.0
    %vm119 = vcmp.gt.f32.partialorder %v115, 0.0
    %v120 = vmax.f32 %v106, 1.0
    %v121 = vmax.f32 %v109, 1.0
    %v122 = vmax.f32 %v112, 1.0
    %v123 = vmax.f32 %v115, 1.0
    %v124 = vrcp.pop %v120
    %v125 = vmul.f32 1.0, %v124
    %v126 = vrcp.pop %v121
    %v127 = vmul.f32 1.0, %v126
    %v128 = vrcp.pop %v122
    %v129 = vmul.f32 1.0, %v128
    %v130 = vrcp.pop %v123
    %v131 = vmul.f32 1.0, %v130
    %v132 = vsel %vm116, %v125, 0.0
    %v133 = vsel %vm117, %v127, 0.0
    %v134 = vsel %vm118, %v129, 0.0
    %v135 = vsel %vm119, %v131, 0.0
    %v136 = vmul.f32 %v99, %v132
    %v137 = vmul.f32 %v100, %v133
    %v138 = vmul.f32 %v101, %v134
    %v139 = vmul.f32 %v102, %v135
    %v140 = vpack.c.bf16 %v137, %v136
    %v141 = vpack.c.bf16 %v139, %v138
    %v142 = vld [vmem:[#allocation2] sm:$0xff]
    %v143 = vld [vmem:[#allocation2 + $0x8] sm:$0xff]
    %v144 = vld [vmem:[#allocation2 + $0x10] sm:$0xff]
    %v145 = vld [vmem:[#allocation2 + $0x18] sm:$0xff]
    %v146 = vpack.c.bf16 %v143, %v142
    %v147 = vpack.c.bf16 %v145, %v144
    %v148 = vld [vmem:[#allocation7] sm:$0xf]
    %v149 = vld [vmem:[#allocation7 + $0x4] sm:$0xf]
    %v150 = vld [vmem:[#allocation7 + $0x8] sm:$0xf]
    %v151 = vld [vmem:[#allocation7 + $0xc] sm:$0xf]
    %v152 = vld [vmem:[#allocation7 + $0x10] sm:$0xf]
    %v153 = vld [vmem:[#allocation7 + $0x14] sm:$0xf]
    %v154 = vld [vmem:[#allocation7 + $0x18] sm:$0xf]
    %v155 = vld [vmem:[#allocation7 + $0x1c] sm:$0xf]
    %v156 = vld [vmem:[#allocation7 + $0x20] sm:$0xf]
    %v157 = vld [vmem:[#allocation7 + $0x24] sm:$0xf]
    %v158 = vld [vmem:[#allocation7 + $0x28] sm:$0xf]
    %v159 = vld [vmem:[#allocation7 + $0x2c] sm:$0xf]
    %v160 = vld [vmem:[#allocation7 + $0x30] sm:$0xf]
    %v161 = vld [vmem:[#allocation7 + $0x34] sm:$0xf]
    %v162 = vld [vmem:[#allocation7 + $0x38] sm:$0xf]
    %v163 = vld [vmem:[#allocation7 + $0x3c] sm:$0xf]
    %v164 = vld [vmem:[%s3] sm:$0x1]
    %v166 = vlaneseq
    %v167 = vshrl.u32 %v166, 7
    %v168 = vsub.s32 0, %v167
    %v169 = vrot.slane %v164, %v168
    %v187 = vunpack.c.l.b16 %v148
    %v188 = vunpack.c.l.b16 %v149
    %v189 = vunpack.c.l.b16 %v150
    %v190 = vunpack.c.l.b16 %v151
    %v191 = vunpack.c.l.b16 %v152
    %v192 = vunpack.c.l.b16 %v153
    %v193 = vunpack.c.l.b16 %v154
    %v194 = vunpack.c.l.b16 %v155
    %v195 = vunpack.c.l.b16 %v156
    %v196 = vunpack.c.l.b16 %v157
    %v197 = vunpack.c.l.b16 %v158
    %v198 = vunpack.c.l.b16 %v159
    %v199 = vunpack.c.l.b16 %v160
    %v200 = vunpack.c.l.b16 %v161
    %v201 = vunpack.c.l.b16 %v162
    %v202 = vunpack.c.l.b16 %v163
    %v203 = vpack.c.b16 %v188, %v187
    %v204 = vpack.c.b16 %v190, %v189
    %v205 = vpack.c.b16 %v192, %v191
    %v206 = vpack.c.b16 %v194, %v193
    %v207 = vpack.c.b16 %v196, %v195
    %v208 = vpack.c.b16 %v198, %v197
    %v209 = vpack.c.b16 %v200, %v199
    %v210 = vpack.c.b16 %v202, %v201
    %219 = vmatprep.subr.bf16.mxu0 0
    %220 = vmatpush1.bf16.msra.mxu0 %v210
    %221 = vmatprep.subr.bf16.mxu0 0
    %222 = vmatpush1.bf16.msra.mxu0 %v209
    %223 = vmatprep.subr.bf16.mxu0 0
    %224 = vmatpush1.bf16.msra.mxu0 %v208
    %225 = vmatprep.subr.bf16.mxu0 0
    %226 = vmatpush1.bf16.msra.mxu0 %v207
    %227 = vmatprep.subr.bf16.mxu0 0
    %228 = vmatpush1.bf16.msra.mxu0 %v206
    %229 = vmatprep.subr.bf16.mxu0 0
    %230 = vmatpush1.bf16.msra.mxu0 %v205
    %231 = vmatprep.subr.bf16.mxu0 0
    %232 = vmatpush1.bf16.msra.mxu0 %v204
    %233 = vmatprep.subr.bf16.mxu0 0
    %234 = vmatpush1.bf16.msra.mxu0 %v203
    %235 = vmatprep.subr.bf16.mxu0 0
    %236 = vmatpush2.bf16.msra.mxu0 0
    %237 = vmatprep.subr.bf16.mxu0 0
    %238 = vmatpush2.bf16.msra.mxu0 0
    %239 = vmatprep.subr.bf16.mxu0 0
    %240 = vmatpush2.bf16.msra.mxu0 0
    %241 = vmatprep.subr.bf16.mxu0 0
    %242 = vmatpush2.bf16.msra.mxu0 0
    %243 = vmatprep.subr.bf16.mxu0 0
    %244 = vmatpush2.bf16.msra.mxu0 0
    %245 = vmatprep.subr.bf16.mxu0 0
    %246 = vmatpush2.bf16.msra.mxu0 0
    %247 = vmatprep.subr.bf16.mxu0 0
    %248 = vmatpush2.bf16.msra.mxu0 0
    %249 = vmatprep.subr.bf16.mxu0 0
    %250 = vmatpush2.bf16.msra.mxu0 0
    %251 = vmatprep.mubr.bf16.mxu0 0
    %252 = vmatmul.mubr.bf16.gmra.mxu0 %v146
    %v253 = vpop.f32.mrf.mxu0
    %v254 = vadd.f32 %v169, %v253
    %v255 = vpop.f32.mrf.mxu0
    %v256 = vpop.f32.mrf.mxu0
    %v257 = vadd.f32 %v169, %v256
    %v258 = vpop.f32.mrf.mxu0
    %259 = vmatprep.mubr.bf16.mxu0 0
    %260 = vmatmul.mubr.bf16.gmra.mxu0 %v147
    %v261 = vpop.f32.mrf.mxu0
    %v262 = vadd.f32 %v169, %v261
    %v263 = vpop.f32.mrf.mxu0
    %v264 = vpop.f32.mrf.mxu0
    %v265 = vadd.f32 %v169, %v264
    %v266 = vpop.f32.mrf.mxu0
    %267 = vdwg.mxu0
    %v268 = vtanh.pop %v254
    %v269 = vtanh.pop %v257
    %v270 = vtanh.pop %v262
    %v271 = vtanh.pop %v265
    %v272 = vpack.c.bf16 %v269, %v268
    %v273 = vpack.c.bf16 %v271, %v270
    %v275 = vsel %vm103, %v140, 0
    %v278 = vsel %vm103, %v141, 0
    %280 = vmatprep.subr.bf16.mxu0 0
    %281 = vmatpush1.bf16.msra.mxu0 0
    %282 = vmatprep.subr.bf16.mxu0 0
    %283 = vmatpush1.bf16.msra.mxu0 0
    %284 = vmatprep.subr.bf16.mxu0 0
    %285 = vmatpush1.bf16.msra.mxu0 0
    %286 = vmatprep.subr.bf16.mxu0 0
    %287 = vmatpush1.bf16.msra.mxu0 0
    %288 = vmatprep.subr.bf16.mxu0 0
    %289 = vmatpush1.bf16.msra.mxu0 0
    %290 = vmatprep.subr.bf16.mxu0 0
    %291 = vmatpush1.bf16.msra.mxu0 0
    %292 = vmatprep.subr.bf16.mxu0 0
    %293 = vmatpush1.bf16.msra.mxu0 %v273
    %294 = vmatprep.subr.bf16.mxu0 0
    %295 = vmatpush1.bf16.msra.mxu0 %v272
    %296 = vmatprep.subr.bf16.mxu0 0
    %297 = vmatpush2.bf16.msra.mxu0 0
    %298 = vmatprep.subr.bf16.mxu0 0
    %299 = vmatpush2.bf16.msra.mxu0 0
    %300 = vmatprep.subr.bf16.mxu0 0
    %301 = vmatpush2.bf16.msra.mxu0 0
    %302 = vmatprep.subr.bf16.mxu0 0
    %303 = vmatpush2.bf16.msra.mxu0 0
    %304 = vmatprep.subr.bf16.mxu0 0
    %305 = vmatpush2.bf16.msra.mxu0 0
    %306 = vmatprep.subr.bf16.mxu0 0
    %307 = vmatpush2.bf16.msra.mxu0 0
    %308 = vmatprep.subr.bf16.mxu0 0
    %309 = vmatpush2.bf16.msra.mxu0 0
    %310 = vmatprep.subr.bf16.mxu0 0
    %311 = vmatpush2.bf16.msra.mxu0 0
    %312 = vmatprep.mubr.bf16.mxu0 0
    %313 = vmatmul.mubr.bf16.gmra.mxu0 %v275
    %v314 = vpop.f32.mrf.mxu0
    %v315 = vadd.f32 0.0, %v314
    %v316 = vpop.f32.mrf.mxu0
    %v317 = vpop.f32.mrf.mxu0
    %v318 = vadd.f32 0.0, %v317
    %v319 = vpop.f32.mrf.mxu0
    %320 = vmatprep.mubr.bf16.mxu0 0
    %321 = vmatmul.mubr.bf16.gmra.mxu0 %v278
    %v322 = vpop.f32.mrf.mxu0
    %v323 = vadd.f32 0.0, %v322
    %v324 = vpop.f32.mrf.mxu0
    %v325 = vpop.f32.mrf.mxu0
    %v326 = vadd.f32 0.0, %v325
    %v327 = vpop.f32.mrf.mxu0
    %328 = vdwg.mxu0
    %v329 = vpack.c.bf16 %v318, %v315
    %v330 = vpack.c.bf16 %v326, %v323
    %v331 = vld [vmem:[#allocation8] sm:$0xf]
    %v332 = vld [vmem:[#allocation8 + $0x4] sm:$0xf]
    %v333 = vld [vmem:[#allocation8 + $0x8] sm:$0xf]
    %v334 = vld [vmem:[#allocation8 + $0xc] sm:$0xf]
    %v335 = vld [vmem:[#allocation8 + $0x10] sm:$0xf]
    %v336 = vld [vmem:[#allocation8 + $0x14] sm:$0xf]
    %v337 = vld [vmem:[#allocation8 + $0x18] sm:$0xf]
    %v338 = vld [vmem:[#allocation8 + $0x1c] sm:$0xf]
    %v339 = vld [vmem:[#allocation8 + $0x20] sm:$0xf]
    %v340 = vld [vmem:[#allocation8 + $0x24] sm:$0xf]
    %v341 = vld [vmem:[#allocation8 + $0x28] sm:$0xf]
    %v342 = vld [vmem:[#allocation8 + $0x2c] sm:$0xf]
    %v343 = vld [vmem:[#allocation8 + $0x30] sm:$0xf]
    %v344 = vld [vmem:[#allocation8 + $0x34] sm:$0xf]
    %v345 = vld [vmem:[#allocation8 + $0x38] sm:$0xf]
    %v346 = vld [vmem:[#allocation8 + $0x3c] sm:$0xf]
    %v347 = vld [vmem:[#allocation8 + $0x40] sm:$0xf]
    %v348 = vld [vmem:[#allocation8 + $0x44] sm:$0xf]
    %v349 = vld [vmem:[#allocation8 + $0x48] sm:$0xf]
    %v350 = vld [vmem:[#allocation8 + $0x4c] sm:$0xf]
    %v351 = vld [vmem:[#allocation8 + $0x50] sm:$0xf]
    %v352 = vld [vmem:[#allocation8 + $0x54] sm:$0xf]
    %v353 = vld [vmem:[#allocation8 + $0x58] sm:$0xf]
    %v354 = vld [vmem:[#allocation8 + $0x5c] sm:$0xf]
    %v355 = vld [vmem:[#allocation8 + $0x60] sm:$0xf]
    %v356 = vld [vmem:[#allocation8 + $0x64] sm:$0xf]
    %v357 = vld [vmem:[#allocation8 + $0x68] sm:$0xf]
    %v358 = vld [vmem:[#allocation8 + $0x6c] sm:$0xf]
    %v359 = vld [vmem:[#allocation8 + $0x70] sm:$0xf]
    %v360 = vld [vmem:[#allocation8 + $0x74] sm:$0xf]
    %v361 = vld [vmem:[#allocation8 + $0x78] sm:$0xf]
    %v362 = vld [vmem:[#allocation8 + $0x7c] sm:$0xf]
    %v363 = vld [vmem:[%s5] sm:$0x1]
    %v365 = vlaneseq
    %v366 = vshrl.u32 %v365, 7
    %v367 = vsub.s32 0, %v366
    %v368 = vrot.slane %v363, %v367
    %v402 = vunpack.c.l.b16 %v331
    %v403 = vunpack.c.l.b16 %v332
    %v404 = vunpack.c.l.b16 %v333
    %v405 = vunpack.c.l.b16 %v334
    %v406 = vunpack.c.l.b16 %v335
    %v407 = vunpack.c.l.b16 %v336
    %v408 = vunpack.c.l.b16 %v337
    %v409 = vunpack.c.l.b16 %v338
    %v410 = vunpack.c.l.b16 %v339
    %v411 = vunpack.c.l.b16 %v340
    %v412 = vunpack.c.l.b16 %v341
    %v413 = vunpack.c.l.b16 %v342
    %v414 = vunpack.c.l.b16 %v343
    %v415 = vunpack.c.l.b16 %v344
    %v416 = vunpack.c.l.b16 %v345
    %v417 = vunpack.c.l.b16 %v346
    %v418 = vunpack.c.l.b16 %v347
    %v419 = vunpack.c.l.b16 %v348
    %v420 = vunpack.c.l.b16 %v349
    %v421 = vunpack.c.l.b16 %v350
    %v422 = vunpack.c.l.b16 %v351
    %v423 = vunpack.c.l.b16 %v352
    %v424 = vunpack.c.l.b16 %v353
    %v425 = vunpack.c.l.b16 %v354
    %v426 = vunpack.c.l.b16 %v355
    %v427 = vunpack.c.l.b16 %v356
    %v428 = vunpack.c.l.b16 %v357
    %v429 = vunpack.c.l.b16 %v358
    %v430 = vunpack.c.l.b16 %v359
    %v431 = vunpack.c.l.b16 %v360
    %v432 = vunpack.c.l.b16 %v361
    %v433 = vunpack.c.l.b16 %v362
    %v434 = vpack.c.b16 %v403, %v402
    %v435 = vpack.c.b16 %v405, %v404
    %v436 = vpack.c.b16 %v407, %v406
    %v437 = vpack.c.b16 %v409, %v408
    %v438 = vpack.c.b16 %v411, %v410
    %v439 = vpack.c.b16 %v413, %v412
    %v440 = vpack.c.b16 %v415, %v414
    %v441 = vpack.c.b16 %v417, %v416
    %v442 = vpack.c.b16 %v419, %v418
    %v443 = vpack.c.b16 %v421, %v420
    %v444 = vpack.c.b16 %v423, %v422
    %v445 = vpack.c.b16 %v425, %v424
    %v446 = vpack.c.b16 %v427, %v426
    %v447 = vpack.c.b16 %v429, %v428
    %v448 = vpack.c.b16 %v431, %v430
    %v449 = vpack.c.b16 %v433, %v432
    %466 = vmatprep.subr.bf16.mxu0 0
    %467 = vmatpush1.bf16.msra.mxu0 %v441
    %468 = vmatprep.subr.bf16.mxu0 0
    %469 = vmatpush1.bf16.msra.mxu0 %v440
    %470 = vmatprep.subr.bf16.mxu0 0
    %471 = vmatpush1.bf16.msra.mxu0 %v439
    %472 = vmatprep.subr.bf16.mxu0 0
    %473 = vmatpush1.bf16.msra.mxu0 %v438
    %474 = vmatprep.subr.bf16.mxu0 0
    %475 = vmatpush1.bf16.msra.mxu0 %v437
    %476 = vmatprep.subr.bf16.mxu0 0
    %477 = vmatpush1.bf16.msra.mxu0 %v436
    %478 = vmatprep.subr.bf16.mxu0 0
    %479 = vmatpush1.bf16.msra.mxu0 %v435
    %480 = vmatprep.subr.bf16.mxu0 0
    %481 = vmatpush1.bf16.msra.mxu0 %v434
    %482 = vmatprep.subr.bf16.mxu0 0
    %483 = vmatpush2.bf16.msra.mxu0 %v449
    %484 = vmatprep.subr.bf16.mxu0 0
    %485 = vmatpush2.bf16.msra.mxu0 %v448
    %486 = vmatprep.subr.bf16.mxu0 0
    %487 = vmatpush2.bf16.msra.mxu0 %v447
    %488 = vmatprep.subr.bf16.mxu0 0
    %489 = vmatpush2.bf16.msra.mxu0 %v446
    %490 = vmatprep.subr.bf16.mxu0 0
    %491 = vmatpush2.bf16.msra.mxu0 %v445
    %492 = vmatprep.subr.bf16.mxu0 0
    %493 = vmatpush2.bf16.msra.mxu0 %v444
    %494 = vmatprep.subr.bf16.mxu0 0
    %495 = vmatpush2.bf16.msra.mxu0 %v443
    %496 = vmatprep.subr.bf16.mxu0 0
    %497 = vmatpush2.bf16.msra.mxu0 %v442
    %498 = vmatprep.mubr.bf16.mxu0 %v329
    %499 = vmatmul.mubr.bf16.gmra.mxu0 %v272
    %v500 = vpop.f32.mrf.mxu0
    %v501 = vadd.f32 %v368, %v500
    %v502 = vpop.f32.mrf.mxu0
    %v503 = vpop.f32.mrf.mxu0
    %v504 = vadd.f32 %v368, %v503
    %v505 = vpop.f32.mrf.mxu0
    %506 = vmatprep.mubr.bf16.mxu0 %v330
    %507 = vmatmul.mubr.bf16.gmra.mxu0 %v273
    %v508 = vpop.f32.mrf.mxu0
    %v509 = vadd.f32 %v368, %v508
    %v510 = vpop.f32.mrf.mxu0
    %v511 = vpop.f32.mrf.mxu0
    %v512 = vadd.f32 %v368, %v511
    %v513 = vpop.f32.mrf.mxu0
    %514 = vdwg.mxu0
    %v515 = vmax.f32 %v501, 0.0
    %v516 = vmax.f32 %v504, 0.0
    %v517 = vmax.f32 %v509, 0.0
    %v518 = vmax.f32 %v512, 0.0
    %v519 = vpack.c.bf16 %v516, %v515
    %v520 = vpack.c.bf16 %v518, %v517
    %521 = vmatprep.subr.bf16.mxu0 0
    %522 = vmatpush1.bf16.msra.mxu0 0
    %523 = vmatprep.subr.bf16.mxu0 0
    %524 = vmatpush1.bf16.msra.mxu0 0
    %525 = vmatprep.subr.bf16.mxu0 0
    %526 = vmatpush1.bf16.msra.mxu0 0
    %527 = vmatprep.subr.bf16.mxu0 0
    %528 = vmatpush1.bf16.msra.mxu0 0
    %529 = vmatprep.subr.bf16.mxu0 0
    %530 = vmatpush1.bf16.msra.mxu0 0
    %531 = vmatprep.subr.bf16.mxu0 0
    %532 = vmatpush1.bf16.msra.mxu0 0
    %533 = vmatprep.subr.bf16.mxu0 0
    %534 = vmatpush1.bf16.msra.mxu0 %v520
    %535 = vmatprep.subr.bf16.mxu0 0
    %536 = vmatpush1.bf16.msra.mxu0 %v519
    %537 = vmatprep.subr.bf16.mxu0 0
    %538 = vmatpush2.bf16.msra.mxu0 0
    %539 = vmatprep.subr.bf16.mxu0 0
    %540 = vmatpush2.bf16.msra.mxu0 0
    %541 = vmatprep.subr.bf16.mxu0 0
    %542 = vmatpush2.bf16.msra.mxu0 0
    %543 = vmatprep.subr.bf16.mxu0 0
    %544 = vmatpush2.bf16.msra.mxu0 0
    %545 = vmatprep.subr.bf16.mxu0 0
    %546 = vmatpush2.bf16.msra.mxu0 0
    %547 = vmatprep.subr.bf16.mxu0 0
    %548 = vmatpush2.bf16.msra.mxu0 0
    %549 = vmatprep.subr.bf16.mxu0 0
    %550 = vmatpush2.bf16.msra.mxu0 0
    %551 = vmatprep.subr.bf16.mxu0 0
    %552 = vmatpush2.bf16.msra.mxu0 0
    %553 = vmatprep.mubr.bf16.mxu0 0
    %554 = vmatmul.mubr.bf16.gmra.mxu0 %v275
    %v555 = vpop.f32.mrf.mxu0
    %v556 = vadd.f32 0.0, %v555
    %v557 = vpop.f32.mrf.mxu0
    %v558 = vpop.f32.mrf.mxu0
    %v559 = vadd.f32 0.0, %v558
    %v560 = vpop.f32.mrf.mxu0
    %561 = vmatprep.mubr.bf16.mxu0 0
    %562 = vmatmul.mubr.bf16.gmra.mxu0 %v278
    %v563 = vpop.f32.mrf.mxu0
    %v564 = vadd.f32 0.0, %v563
    %v565 = vpop.f32.mrf.mxu0
    %v566 = vpop.f32.mrf.mxu0
    %v567 = vadd.f32 0.0, %v566
    %v568 = vpop.f32.mrf.mxu0
    %569 = vdwg.mxu0
    %v570 = vpack.c.bf16 %v559, %v556
    %v571 = vpack.c.bf16 %v567, %v564
    %v572 = vld [vmem:[#allocation10] sm:$0xf]
    %v573 = vld [vmem:[#allocation10 + $0x4] sm:$0xf]
    %v574 = vld [vmem:[#allocation10 + $0x8] sm:$0xf]
    %v575 = vld [vmem:[#allocation10 + $0xc] sm:$0xf]
    %v576 = vld [vmem:[#allocation10 + $0x10] sm:$0xf]
    %v577 = vld [vmem:[#allocation10 + $0x14] sm:$0xf]
    %v578 = vld [vmem:[#allocation10 + $0x18] sm:$0xf]
    %v579 = vld [vmem:[#allocation10 + $0x1c] sm:$0xf]
    %v580 = vld [vmem:[#allocation10 + $0x20] sm:$0xf]
    %v581 = vld [vmem:[#allocation10 + $0x24] sm:$0xf]
    %v582 = vld [vmem:[#allocation10 + $0x28] sm:$0xf]
    %v583 = vld [vmem:[#allocation10 + $0x2c] sm:$0xf]
    %v584 = vld [vmem:[#allocation10 + $0x30] sm:$0xf]
    %v585 = vld [vmem:[#allocation10 + $0x34] sm:$0xf]
    %v586 = vld [vmem:[#allocation10 + $0x38] sm:$0xf]
    %v587 = vld [vmem:[#allocation10 + $0x3c] sm:$0xf]
    %v588 = vld [vmem:[#allocation10 + $0x40] sm:$0xf]
    %v589 = vld [vmem:[#allocation10 + $0x44] sm:$0xf]
    %v590 = vld [vmem:[#allocation10 + $0x48] sm:$0xf]
    %v591 = vld [vmem:[#allocation10 + $0x4c] sm:$0xf]
    %v592 = vld [vmem:[#allocation10 + $0x50] sm:$0xf]
    %v593 = vld [vmem:[#allocation10 + $0x54] sm:$0xf]
    %v594 = vld [vmem:[#allocation10 + $0x58] sm:$0xf]
    %v595 = vld [vmem:[#allocation10 + $0x5c] sm:$0xf]
    %v596 = vld [vmem:[#allocation10 + $0x60] sm:$0xf]
    %v597 = vld [vmem:[#allocation10 + $0x64] sm:$0xf]
    %v598 = vld [vmem:[#allocation10 + $0x68] sm:$0xf]
    %v599 = vld [vmem:[#allocation10 + $0x6c] sm:$0xf]
    %v600 = vld [vmem:[#allocation10 + $0x70] sm:$0xf]
    %v601 = vld [vmem:[#allocation10 + $0x74] sm:$0xf]
    %v602 = vld [vmem:[#allocation10 + $0x78] sm:$0xf]
    %v603 = vld [vmem:[#allocation10 + $0x7c] sm:$0xf]
    %v604 = vld [vmem:[%s7] sm:$0x1]
    %v606 = vlaneseq
    %v607 = vshrl.u32 %v606, 7
    %v608 = vsub.s32 0, %v607
    %v609 = vrot.slane %v604, %v608
    %v643 = vunpack.c.l.b16 %v572
    %v644 = vunpack.c.l.b16 %v573
    %v645 = vunpack.c.l.b16 %v574
    %v646 = vunpack.c.l.b16 %v575
    %v647 = vunpack.c.l.b16 %v576
    %v648 = vunpack.c.l.b16 %v577
    %v649 = vunpack.c.l.b16 %v578
    %v650 = vunpack.c.l.b16 %v579
    %v651 = vunpack.c.l.b16 %v580
    %v652 = vunpack.c.l.b16 %v581
    %v653 = vunpack.c.l.b16 %v582
    %v654 = vunpack.c.l.b16 %v583
    %v655 = vunpack.c.l.b16 %v584
    %v656 = vunpack.c.l.b16 %v585
    %v657 = vunpack.c.l.b16 %v586
    %v658 = vunpack.c.l.b16 %v587
    %v659 = vunpack.c.l.b16 %v588
    %v660 = vunpack.c.l.b16 %v589
    %v661 = vunpack.c.l.b16 %v590
    %v662 = vunpack.c.l.b16 %v591
    %v663 = vunpack.c.l.b16 %v592
    %v664 = vunpack.c.l.b16 %v593
    %v665 = vunpack.c.l.b16 %v594
    %v666 = vunpack.c.l.b16 %v595
    %v667 = vunpack.c.l.b16 %v596
    %v668 = vunpack.c.l.b16 %v597
    %v669 = vunpack.c.l.b16 %v598
    %v670 = vunpack.c.l.b16 %v599
    %v671 = vunpack.c.l.b16 %v600
    %v672 = vunpack.c.l.b16 %v601
    %v673 = vunpack.c.l.b16 %v602
    %v674 = vunpack.c.l.b16 %v603
    %v675 = vpack.c.b16 %v644, %v643
    %v676 = vpack.c.b16 %v646, %v645
    %v677 = vpack.c.b16 %v648, %v647
    %v678 = vpack.c.b16 %v650, %v649
    %v679 = vpack.c.b16 %v652, %v651
    %v680 = vpack.c.b16 %v654, %v653
    %v681 = vpack.c.b16 %v656, %v655
    %v682 = vpack.c.b16 %v658, %v657
    %v683 = vpack.c.b16 %v660, %v659
    %v684 = vpack.c.b16 %v662, %v661
    %v685 = vpack.c.b16 %v664, %v663
    %v686 = vpack.c.b16 %v666, %v665
    %v687 = vpack.c.b16 %v668, %v667
    %v688 = vpack.c.b16 %v670, %v669
    %v689 = vpack.c.b16 %v672, %v671
    %v690 = vpack.c.b16 %v674, %v673
    %707 = vmatprep.subr.bf16.mxu0 0
    %708 = vmatpush1.bf16.msra.mxu0 %v682
    %709 = vmatprep.subr.bf16.mxu0 0
    %710 = vmatpush1.bf16.msra.mxu0 %v681
    %711 = vmatprep.subr.bf16.mxu0 0
    %712 = vmatpush1.bf16.msra.mxu0 %v680
    %713 = vmatprep.subr.bf16.mxu0 0
    %714 = vmatpush1.bf16.msra.mxu0 %v679
    %715 = vmatprep.subr.bf16.mxu0 0
    %716 = vmatpush1.bf16.msra.mxu0 %v678
    %717 = vmatprep.subr.bf16.mxu0 0
    %718 = vmatpush1.bf16.msra.mxu0 %v677
    %719 = vmatprep.subr.bf16.mxu0 0
    %720 = vmatpush1.bf16.msra.mxu0 %v676
    %721 = vmatprep.subr.bf16.mxu0 0
    %722 = vmatpush1.bf16.msra.mxu0 %v675
    %723 = vmatprep.subr.bf16.mxu0 0
    %724 = vmatpush2.bf16.msra.mxu0 %v690
    %725 = vmatprep.subr.bf16.mxu0 0
    %726 = vmatpush2.bf16.msra.mxu0 %v689
    %727 = vmatprep.subr.bf16.mxu0 0
    %728 = vmatpush2.bf16.msra.mxu0 %v688
    %729 = vmatprep.subr.bf16.mxu0 0
    %730 = vmatpush2.bf16.msra.mxu0 %v687
    %731 = vmatprep.subr.bf16.mxu0 0
    %732 = vmatpush2.bf16.msra.mxu0 %v686
    %733 = vmatprep.subr.bf16.mxu0 0
    %734 = vmatpush2.bf16.msra.mxu0 %v685
    %735 = vmatprep.subr.bf16.mxu0 0
    %736 = vmatpush2.bf16.msra.mxu0 %v684
    %737 = vmatprep.subr.bf16.mxu0 0
    %738 = vmatpush2.bf16.msra.mxu0 %v683
    %739 = vmatprep.mubr.bf16.mxu0 %v570
    %740 = vmatmul.mubr.bf16.gmra.mxu0 %v519
    %v741 = vpop.f32.mrf.mxu0
    %v742 = vadd.f32 %v609, %v741
    %v743 = vpop.f32.mrf.mxu0
    %v744 = vpop.f32.mrf.mxu0
    %v745 = vadd.f32 %v609, %v744
    %v746 = vpop.f32.mrf.mxu0
    %747 = vmatprep.mubr.bf16.mxu0 %v571
    %748 = vmatmul.mubr.bf16.gmra.mxu0 %v520
    %v749 = vpop.f32.mrf.mxu0
    %v750 = vadd.f32 %v609, %v749
    %v751 = vpop.f32.mrf.mxu0
    %v752 = vpop.f32.mrf.mxu0
    %v753 = vadd.f32 %v609, %v752
    %v754 = vpop.f32.mrf.mxu0
    %755 = vdwg.mxu0
    %v756 = vmax.f32 %v742, 0.0
    %v757 = vmax.f32 %v745, 0.0
    %v758 = vmax.f32 %v750, 0.0
    %v759 = vmax.f32 %v753, 0.0
    %760 = vst [vmem:[#allocation11] sm:$0xff] %v756
    %761 = vst [vmem:[#allocation11 + $0x8] sm:$0xff] %v757
    %762 = vst [vmem:[#allocation11 + $0x10] sm:$0xff] %v758
    %763 = vst [vmem:[#allocation11 + $0x18] sm:$0xff] %v759
    // Predicated region
    $region54: #{tpu_custom_call.1} parent=1 // pred_check
      _
    $region55: #{tpu_custom_call.1} parent=1 // pred_check_branch
      %765 = sbr.rel (0) target = $region57
    $region56: #{tpu_custom_call.1} parent=1 // pred_region
      %s767 = ssub.s32 512, 512
      %768 = vsyncadd [#allocation4], %s767
      %s769 = sshll.u32 [#allocation11], 4
      %s770 = int_to_ptr.vmem [resolvable:$true] %s769
      %775 = dma.vmem_to_hbm [thread:$0]  %s770, 512, %s8, [#allocation4], 128, 128, 8
    $region57: #{tpu_custom_call.1} parent=1 // pred_fallthru
      _
    // Predicated region
    $region58: #{tpu_custom_call.1} parent=1 // pred_check
      _
    $region59: #{tpu_custom_call.1} parent=1 // pred_check_branch
      %777 = sbr.rel (0) target = $region61
    $region60: #{tpu_custom_call.1} parent=1 // pred_region
      %778 = dma.done [#allocation4], 512
    $region61: #{tpu_custom_call.1} parent=1 // pred_fallthru
      _
    %779 = vsyncpa [#allocation3], 1
    %780 = vsyncpa [#allocation6], 1
    %781 = vsyncpa [#allocation9], 1
    %782 = vsyncpa [#allocation4], 1

</llo_original>
